<compile_context>
chip_gen: v5e
topology: v5e:2x2
jax: 0.10.0
libtpu: 0.0.40
codegen_flags: <defaults>
</compile_context>

<pallas_src>
import functools
import math

import jax
import jax.numpy as jnp
from jax import lax
from jax.experimental import pallas as pl
from jax.experimental.pallas import tpu as pltpu


def _round_up(x, m):
    return ((x + m - 1) // m) * m


def _auto_megacore_splits():
    """2-way pass-1 split on chips with 2 TensorCores (v7x); 1 elsewhere."""
    try:
        kind = jax.devices()[0].device_kind.lower()
        if "v7" in kind or "7x" in kind:
            return 2
    except Exception:
        pass
    return 1


# ---------------------------------------------------------------------------
# Pass 1 (grid = (splits, n_tiles/splits), semantics = ("parallel","arbitrary")):
# accumulate, per split,
#     ktv_full = phi_k_all^T @ v_all     -> [H*F, H*F]  (lane-dense, off-diagonal
#                                           head blocks masked later in the wrapper)
#     ksum     = sum_n phi_k_all         -> [1,   H*F]  (lane-dense)
# ---------------------------------------------------------------------------
def _ktv_kernel(src_ref, wkv_ref, bkv_ref, bdiag_ref, inv_ns_ref,
                ktv_ref, ksum_ref, *,
                hf, tiles_per_split, tile_rows, n_valid, needs_mask, md):
    c = pl.program_id(0)          # megacore split (parallel)
    t = pl.program_id(1)          # N-tile within split (reduction)

    @pl.when(t == 0)
    def _():
        ktv_ref[...] = jnp.zeros_like(ktv_ref)
        ksum_ref[...] = jnp.zeros_like(ksum_ref)

    x_s = src_ref[...]                                                  # [TN, Fin+1] (md)
    # K|V for all heads in ONE wide matmul (heads stacked on lanes).
    kv = jnp.dot(x_s, wkv_ref[...],
                 preferred_element_type=jnp.float32) + bkv_ref[...]     # [TN, 2*H*F] f32
    k_all = kv[:, :hf]                                                  # lane-aligned slice
    v_all = kv[:, hf:]

    # fp((relu(k)+eps)/ns) == fp(relu(k)+eps) / ns  (ns = |norm_scale|+1e-6 > 0).
    u = jnp.maximum(k_all, 0.0) + 1e-6
    xp = u * u
    xp2 = xp * xp
    b_mm = bdiag_ref[...]                                               # block-diag ones (md)
    # Per-head sum(x^2)/sum(x^4), already broadcast to each head's lanes (MXU).
    s1b = jnp.dot(xp.astype(md), b_mm, preferred_element_type=jnp.float32)
    s2b = jnp.dot(xp2.astype(md), b_mm, preferred_element_type=jnp.float32)
    phi = xp * (jnp.sqrt(s1b) * lax.rsqrt(s2b) * inv_ns_ref[0])         # [TN, H*F] f32

    if needs_mask:   # zero padded rows so they don't pollute ktv / ksum
        row0 = (c * tiles_per_split + t) * tile_rows
        rows = lax.broadcasted_iota(jnp.int32, (tile_rows, 1), 0) + row0
        phi = jnp.where(rows < n_valid, phi, 0.0)

    contract_n = (((0,), (0,)), ((), ()))     # contract the N axis on the MXU
    ktv_ref[...] += lax.dot_general(phi.astype(md), v_all.astype(md), contract_n,
                                    preferred_element_type=jnp.float32)
    ksum_ref[...] += jnp.sum(phi, axis=0, keepdims=True)


# ---------------------------------------------------------------------------
# Pass 2 (grid = (n_tiles,), semantics = ("parallel",)): per N tile compute
# numer/denom for all heads in one wide matmul, heads-mean + folded v_map
# residual via lane-shifted rhs matrices, hyperbolic time column, output.
# ---------------------------------------------------------------------------
def _attn_kernel(qin_ref, sin_ref, wq_ref, bq_ref, bdiag_ref, rhs_ref,
                 mout_ref, wfold_ref, bfold_ref, inv_ns_ref, out_ref, *,
                 hf, manifold_k, md):
    x_q = qin_ref[...]                                                  # [TN, Fin+1] (md)
    q_all = jnp.dot(x_q, wq_ref[...],
                    preferred_element_type=jnp.float32) + bq_ref[...]   # [TN, H*F] f32

    u = jnp.maximum(q_all, 0.0) + 1e-6
    xp = u * u
    xp2 = xp * xp
    b_mm = bdiag_ref[...]
    s1b = jnp.dot(xp.astype(md), b_mm, preferred_element_type=jnp.float32)
    s2b = jnp.dot(xp2.astype(md), b_mm, preferred_element_type=jnp.float32)
    phi_q = (xp * (jnp.sqrt(s1b) * lax.rsqrt(s2b) * inv_ns_ref[0])).astype(md)

    # numer (all heads) and per-head denominator (replicated over each head's
    # lanes) in ONE matmul: rhs = [ktv * blockdiag | blockdiag * ksum].
    nd = jnp.dot(phi_q, rhs_ref[...], preferred_element_type=jnp.float32)  # [TN, 2*H*F]
    numer = nd[:, :hf]
    denom = nd[:, hf:]
    attn = numer * pl.reciprocal(denom + 1e-6, approx=True)             # [TN, H*F]

    # heads-mean (pre-shifted to lanes 1..F) + folded v_map_mlp residual.
    space = (jnp.dot(attn.astype(md), mout_ref[...],
                     preferred_element_type=jnp.float32)
             + jnp.dot(sin_ref[...], wfold_ref[...],
                       preferred_element_type=jnp.float32)
             + bfold_ref[...])                                           # [TN, F+1], col0 == 0
    time = jnp.sqrt(jnp.sum(space * space, axis=-1, keepdims=True) + manifold_k)
    col = lax.broadcasted_iota(jnp.int32, (1, space.shape[-1]), 1)
    out_ref[...] = space + time * (col == 0).astype(jnp.float32)         # [time | space]


def trans_conv_layer(query_input, source_input, params, *, num_heads,
                     manifold_k=1.0, tile_n=1024, matmul_dtype=jnp.bfloat16,
                     megacore_split=None):
    n, fin1 = query_input.shape
    assert source_input.shape == (n, fin1)
    h = num_heads
    fout = params["Wq"].shape[-1]
    hf = h * fout
    assert params["Wq"].shape == (h, fin1, fout)
    # v_map_mlp = Linear(in_channels, out_channels) is applied to the
    # out_channels-wide value => requires in_channels == out_channels.
    assert params["W_vmap"].shape == (fout, fout), "v_map_mlp requires in==out channels"

    f32 = jnp.float32
    md = matmul_dtype        # bf16 MXU operands by default; elementwise stays f32

    # ---- N tiling: pad to whole 8-aligned tiles, mask the tail in pass 1 ----
    tn = _round_up(min(tile_n, _round_up(n, 8)), 8)
    n_padded = _round_up(n, tn)
    n_pad = n_padded - n
    n_tiles = n_padded // tn

    splits = _auto_megacore_splits() if megacore_split is None else int(megacore_split)
    splits = max(1, splits)
    if n_tiles % splits != 0:
        splits = 1
    tiles_per_split = n_tiles // splits

    # ---- weight packing (all heads stacked on the lane axis) ----
    wq = jnp.transpose(params["Wq"], (1, 0, 2)).reshape(fin1, hf).astype(md)
    wk = jnp.transpose(params["Wk"], (1, 0, 2)).reshape(fin1, hf).astype(f32)
    wv = jnp.transpose(params["Wv"], (1, 0, 2)).reshape(fin1, hf).astype(f32)
    wkv = jnp.concatenate([wk, wv], axis=1).astype(md)               # [Fin+1, 2*H*F]
    bq = params["bq"].reshape(1, hf).astype(f32)
    bkv = jnp.concatenate([params["bk"].reshape(1, hf),
                           params["bv"].reshape(1, hf)], axis=1).astype(f32)

    # Block-diagonal ones matrix: per-head reduce+broadcast rhs and head mask.
    bdiag = jnp.kron(jnp.eye(h, dtype=f32), jnp.ones((fout, fout), f32))   # [H*F, H*F]
    bdiag_md = bdiag.astype(md)

    # Heads-mean matrix, pre-shifted one lane (column 0 reserved for time coord).
    m_out = jnp.tile(
        jnp.concatenate([jnp.zeros((fout, 1), f32),
                         jnp.eye(fout, dtype=f32) / h], axis=1),
        (h, 1)).astype(md)                                            # [H*F, F+1]

    # v_map_mlp folded through the heads-mean of the V projection (same lane shift):
    #   mean_h(v_h @ Wvm + bvm) == x_s @ (mean_h(Wv_h) @ Wvm) + (mean_h(bv_h) @ Wvm + bvm)
    wv_mean = jnp.mean(params["Wv"].astype(f32), axis=0)              # [Fin+1, F]
    bv_mean = jnp.mean(params["bv"].astype(f32), axis=0)              # [F]
    w_fold = wv_mean @ params["W_vmap"].astype(f32)                   # [Fin+1, F]
    b_fold = bv_mean @ params["W_vmap"].astype(f32) + params["b_vmap"].astype(f32)
    w_fold = jnp.concatenate([jnp.zeros((fin1, 1), f32), w_fold], axis=1).astype(md)
    b_fold = jnp.concatenate([jnp.zeros((1, 1), f32),
                              b_fold.reshape(1, fout)], axis=1).astype(f32)

    # Scalar 1 / (|norm_scale| + 1e-6), passed via SMEM.
    inv_ns = (1.0 / (jnp.abs(params["norm_scale"].astype(f32)) + 1e-6)).reshape(1)

    xq = query_input.astype(md)
    xs = source_input.astype(md)
    if n_pad:
        xq = jnp.pad(xq, ((0, n_pad), (0, 0)))
        xs = jnp.pad(xs, ((0, n_pad), (0, 0)))

    smem_spec = pl.BlockSpec(memory_space=pltpu.MemorySpace.SMEM)
    const2 = lambda *_: (0, 0)
    item = jnp.dtype(md).itemsize

    # ---- Pass 1: ktv / ksum accumulation over N tiles ----
    kern1 = functools.partial(
        _ktv_kernel, hf=hf, tiles_per_split=tiles_per_split, tile_rows=tn,
        n_valid=n, needs_mask=(n_pad > 0), md=md)
    ktv_parts, ksum_parts = pl.pallas_call(
        kern1,
        out_shape=(jax.ShapeDtypeStruct((splits, hf, hf), f32),
                   jax.ShapeDtypeStruct((splits, 1, hf), f32)),
        grid_spec=pltpu.PrefetchScalarGridSpec(
            num_scalar_prefetch=0,
            grid=(splits, tiles_per_split),
            in_specs=[
                pl.BlockSpec((tn, fin1),
                             lambda c, t, tps=tiles_per_split: (c * tps + t, 0)),
                pl.BlockSpec((fin1, 2 * hf), const2),     # Wk|Wv fused
                pl.BlockSpec((1, 2 * hf), const2),        # bk|bv
                pl.BlockSpec((hf, hf), const2),           # block-diag ones
                smem_spec,                                # inv_norm_scale scalar
            ],
            out_specs=[
                pl.BlockSpec((None, hf, hf), lambda c, t: (c, 0, 0)),   # ktv partial
                pl.BlockSpec((None, 1, hf), lambda c, t: (c, 0, 0)),    # ksum partial
            ],
        ),
        compiler_params=pltpu.CompilerParams(
            dimension_semantics=("parallel", "arbitrary")),
        cost_estimate=pl.CostEstimate(
            flops=int(2 * n_padded * (fin1 * 2 * hf + 3 * hf * hf)),
            transcendentals=int(2 * n_padded * hf),
            bytes_accessed=int(n_padded * fin1 * item
                               + 4 * splits * hf * (hf + 1)
                               + item * (fin1 * 2 * hf + hf * hf)),
        ),
    )(xs, wkv, bkv, bdiag_md, inv_ns)

    # Sum the per-core partials, mask cross-head blocks and fold ksum into one
    # lane-dense [H*F, 2*H*F] rhs for pass 2 (tiny wrapper-side ops).
    ktv = jnp.sum(ktv_parts, axis=0)                                  # [H*F, H*F]
    ksum = jnp.sum(ksum_parts, axis=0)                                # [1,  H*F]
    rhs = jnp.concatenate([ktv * bdiag, bdiag * ksum.reshape(hf, 1)],
                          axis=1).astype(md)                          # [H*F, 2*H*F]

    # ---- Pass 2: per-tile attention output (independent tiles -> parallel) ----
    kern2 = functools.partial(_attn_kernel, hf=hf,
                              manifold_k=float(manifold_k), md=md)
    tile2 = lambda i: (i, 0)
    c2 = lambda i: (0, 0)
    out = pl.pallas_call(
        kern2,
        out_shape=jax.ShapeDtypeStruct((n_padded, fout + 1), f32),
        grid_spec=pltpu.PrefetchScalarGridSpec(
            num_scalar_prefetch=0,
            grid=(n_tiles,),
            in_specs=[
                pl.BlockSpec((tn, fin1), tile2),          # query_input tile
                pl.BlockSpec((tn, fin1), tile2),          # source_input tile
                pl.BlockSpec((fin1, hf), c2),             # Wq
                pl.BlockSpec((1, hf), c2),                # bq
                pl.BlockSpec((hf, hf), c2),               # block-diag ones
                pl.BlockSpec((hf, 2 * hf), c2),           # [ktv*B | B*ksum]
                pl.BlockSpec((hf, fout + 1), c2),         # heads-mean (lane-shifted)
                pl.BlockSpec((fin1, fout + 1), c2),       # folded v_map weight
                pl.BlockSpec((1, fout + 1), c2),          # folded v_map bias
                smem_spec,                                # inv_norm_scale scalar
            ],
            out_specs=pl.BlockSpec((tn, fout + 1), tile2),
        ),
        compiler_params=pltpu.CompilerParams(dimension_semantics=("parallel",)),
        cost_estimate=pl.CostEstimate(
            flops=int(2 * n_padded * (fin1 * hf + 4 * hf * hf
                                      + hf * (fout + 1) + fin1 * (fout + 1))),
            transcendentals=int(n_padded * (3 * hf + 1)),
            bytes_accessed=int(2 * n_padded * fin1 * item
                               + 4 * n_padded * (fout + 1)
                               + item * hf * (3 * hf + fout + 1)),
        ),
    )(xq, xs, wq, bq, bdiag_md, rhs, m_out, w_fold, b_fold, inv_ns)

    return out[:n] if n_pad else out


def ref_forward(query_input, source_input, params, *, num_heads, manifold_k=1.0):
    """Pure-JAX reference mirroring the PyTorch forward (linear_focused path)."""
    q = jnp.einsum('nf,hfo->nho', query_input, params["Wq"]) + params["bq"][None]
    k = jnp.einsum('nf,hfo->nho', source_input, params["Wk"]) + params["bk"][None]
    v = jnp.einsum('nf,hfo->nho', source_input, params["Wv"]) + params["bv"][None]
    ns = jnp.abs(params["norm_scale"]) + 1e-6
    phi_q = (jax.nn.relu(q) + 1e-6) / ns
    phi_k = (jax.nn.relu(k) + 1e-6) / ns

    def fp(x):
        xp = x ** 2
        nx = jnp.sqrt(jnp.sum(x * x, axis=-1, keepdims=True))
        nxp = jnp.sqrt(jnp.sum(xp * xp, axis=-1, keepdims=True))
        return nx / nxp * xp

    phi_q, phi_k = fp(phi_q), fp(phi_k)
    ktv = jnp.einsum('nhm,nhd->hmd', phi_k, v)
    numer = jnp.einsum('nhm,hmd->nhd', phi_q, ktv)
    denom = jnp.einsum('nhd,hd->nh', phi_q, jnp.einsum('nhd->hd', phi_k))[..., None]
    attn = numer / (denom + 1e-6)
    vss = jnp.einsum('nhd,do->nho', v, params["W_vmap"]) + params["b_vmap"]
    attn = (attn + vss).mean(axis=1)
    t = jnp.sqrt(jnp.sum(attn * attn, axis=-1, keepdims=True) + manifold_k)
    return jnp.concatenate([t, attn], axis=-1)


if __name__ == "__main__":
    # Small shapes consistent with the module. v_map_mlp(in_channels -> out_channels)
    # is applied to the out_channels-wide value, so in_channels == out_channels.
    FIN, FOUT, H = 32, 32, 4
    MANIFOLD_K = 1.0

    key = jax.random.PRNGKey(0)
    keys = jax.random.split(key, 10)

    # HypLinear: nn.Linear(in_channels + 1, out_channels), xavier_uniform(gain=sqrt(2)).
    xav = math.sqrt(2.0) * math.sqrt(6.0 / (FIN + 1 + FOUT))
    vmb = 1.0 / math.sqrt(FIN)
    params = {
        "Wq": jax.random.uniform(keys[0], (H, FIN + 1, FOUT), jnp.float32, -xav, xav),
        "Wk": jax.random.uniform(keys[1], (H, FIN + 1, FOUT), jnp.float32, -xav, xav),
        "Wv": jax.random.uniform(keys[2], (H, FIN + 1, FOUT), jnp.float32, -xav, xav),
        "bq": 0.1 * jax.random.normal(keys[3], (H, FOUT), jnp.float32),
        "bk": 0.1 * jax.random.normal(keys[4], (H, FOUT), jnp.float32),
        "bv": 0.1 * jax.random.normal(keys[5], (H, FOUT), jnp.float32),
        "W_vmap": jax.random.uniform(keys[6], (FIN, FOUT), jnp.float32, -vmb, vmb),
        "b_vmap": jax.random.uniform(keys[7], (FOUT,), jnp.float32, -vmb, vmb),
        "norm_scale": jnp.ones((), jnp.float32),   # nn.Parameter(torch.ones(()))
    }

    # (n_nodes, tile_n, forced_split, matmul_dtype, tolerance)
    #  - cfg 1: single tile, f32 MXU path
    #  - cfg 2: multi-tile ktv reduction with a forced 2-way pass-1 split
    #  - cfg 3: non-divisible N (padded + masked tail), bf16 MXU path
    #  - cfg 4: larger single tile, bf16 MXU path
    configs = [
        (16, 1024, None, jnp.float32, 2e-2),
        (64, 16, 2, jnp.float32, 2e-2),
        (50, 16, None, jnp.bfloat16, 5e-2),
        (256, 1024, None, jnp.bfloat16, 5e-2),
    ]

    for (n_nodes, tile_n, split, mdt, tol) in configs:
        kq, ksrc = jax.random.split(jax.random.fold_in(keys[8], n_nodes))
        query_input = jax.random.normal(kq, (n_nodes, FIN + 1), jnp.float32)
        source_input = jax.random.normal(ksrc, (n_nodes, FIN + 1), jnp.float32)

        out = trans_conv_layer(query_input, source_input, params,
                               num_heads=H, manifold_k=MANIFOLD_K, tile_n=tile_n,
                               matmul_dtype=mdt, megacore_split=split)
        out = jax.block_until_ready(out)

        ref = ref_forward(query_input, source_input, params,
                          num_heads=H, manifold_k=MANIFOLD_K)

        assert out.shape == (n_nodes, FOUT + 1)
        assert bool(jnp.all(jnp.isfinite(out)))
        max_err = float(jnp.max(jnp.abs(out - ref)))
        assert bool(jnp.allclose(out, ref, rtol=tol, atol=tol)), (n_nodes, mdt, max_err)

    print("KERNEL_OK")
</pallas_src>

<mosaic_0001>
module attributes {stable_mosaic.version = 11 : i64} {
  func.func @_ktv_kernel(%arg0: i32, %arg1: i32, %arg2: memref<16x33xf32, #tpu.memory_space<vmem>>, %arg3: memref<33x256xf32, #tpu.memory_space<vmem>>, %arg4: memref<1x256xf32, #tpu.memory_space<vmem>>, %arg5: memref<128x128xf32, #tpu.memory_space<vmem>>, %arg6: memref<1xf32, #tpu.memory_space<smem>>, %arg7: memref<1x128x128xf32, #tpu.memory_space<vmem>>, %arg8: memref<1x1x128xf32, #tpu.memory_space<vmem>>) attributes {dimension_semantics = [#tpu.dimension_semantics<parallel>, #tpu.dimension_semantics<arbitrary>], iteration_bounds = array<i64: 1, 1>, scalar_prefetch = 0 : i64, scratch_operands = 0 : i64, tpu.core_type = #tpu.core_type<tc>, window_params = [{transform_indices = @transform_0, window_bounds = array<i64: 16, 33>}, {pipeline_mode = #tpu.pipeline_mode<synchronous>, transform_indices = @transform_1, window_bounds = array<i64: 33, 256>}, {pipeline_mode = #tpu.pipeline_mode<synchronous>, transform_indices = @transform_2, window_bounds = array<i64: 1, 256>}, {pipeline_mode = #tpu.pipeline_mode<synchronous>, transform_indices = @transform_3, window_bounds = array<i64: 128, 128>}, {transform_indices = @transform_4, window_bounds = array<i64: 1>}, {transform_indices = @transform_5, window_bounds = array<i64: 1, 128, 128>}, {transform_indices = @transform_6, window_bounds = array<i64: 1, 1, 128>}]} {
    %c0_i32 = arith.constant 0 : i32
    %0 = arith.cmpi eq, %arg1, %c0_i32 : i32
    %1 = arith.extui %0 : i1 to i32
    %c0_i32_0 = arith.constant 0 : i32
    %2 = arith.cmpi ne, %1, %c0_i32_0 : i32
    scf.if %2 {
      %cst_27 = arith.constant 0.000000e+00 : f32
      %42 = vector.broadcast %cst_27 : f32 to vector<128x128xf32>
      %c0_28 = arith.constant 0 : index
      %c0_29 = arith.constant 0 : index
      %c0_30 = arith.constant 0 : index
      %43 = vector.load %arg7[%c0_28, %c0_29, %c0_30] : memref<1x128x128xf32, #tpu.memory_space<vmem>>, vector<1x128x128xf32>
      %44 = vector.shape_cast %43 : vector<1x128x128xf32> to vector<128x128xf32>
      %45 = vector.shape_cast %42 : vector<128x128xf32> to vector<1x128x128xf32>
      tpu.vector_store %arg7[%c0_28, %c0_29, %c0_30], %45 {strides = array<i32>} : memref<1x128x128xf32, #tpu.memory_space<vmem>>, vector<1x128x128xf32>,
      %cst_31 = arith.constant 0.000000e+00 : f32
      %46 = vector.broadcast %cst_31 : f32 to vector<1x128xf32>
      %c0_32 = arith.constant 0 : index
      %c0_33 = arith.constant 0 : index
      %c0_34 = arith.constant 0 : index
      %47 = vector.load %arg8[%c0_32, %c0_33, %c0_34] : memref<1x1x128xf32, #tpu.memory_space<vmem>>, vector<1x1x128xf32>
      %48 = vector.shape_cast %47 : vector<1x1x128xf32> to vector<1x128xf32>
      %49 = vector.shape_cast %46 : vector<1x128xf32> to vector<1x1x128xf32>
      tpu.vector_store %arg8[%c0_32, %c0_33, %c0_34], %49 {strides = array<i32>} : memref<1x1x128xf32, #tpu.memory_space<vmem>>, vector<1x1x128xf32>,
    } else {
    }
    %c0 = arith.constant 0 : index
    %c0_1 = arith.constant 0 : index
    %3 = vector.load %arg2[%c0, %c0_1] : memref<16x33xf32, #tpu.memory_space<vmem>>, vector<16x33xf32>
    %c0_2 = arith.constant 0 : index
    %c0_3 = arith.constant 0 : index
    %4 = vector.load %arg3[%c0_2, %c0_3] : memref<33x256xf32, #tpu.memory_space<vmem>>, vector<33x256xf32>
    %cst = arith.constant dense<0.000000e+00> : vector<16x256xf32>
    %5 = tpu.matmul %3, %4, %cst {dimension_numbers = #tpu.dot_dimension_numbers<[1], [0], [0], [1], [0, 0, 1, 1], [], []>} : vector<16x33xf32>, vector<33x256xf32>, vector<16x256xf32> -> vector<16x256xf32>
    %c0_4 = arith.constant 0 : index
    %c0_5 = arith.constant 0 : index
    %6 = vector.load %arg4[%c0_4, %c0_5] : memref<1x256xf32, #tpu.memory_space<vmem>>, vector<1x256xf32>
    %7 = vector.broadcast %6 : vector<1x256xf32> to vector<16x256xf32>
    %8 = arith.addf %5, %7 : vector<16x256xf32>
    %9 = vector.extract_strided_slice %8 {offsets = [0, 0], sizes = [16, 128], strides = [1, 1]} : vector<16x256xf32> to vector<16x128xf32>
    %10 = vector.extract_strided_slice %8 {offsets = [0, 128], sizes = [16, 128], strides = [1, 1]} : vector<16x256xf32> to vector<16x128xf32>
    %cst_6 = arith.constant 0.000000e+00 : f32
    %11 = vector.broadcast %cst_6 : f32 to vector<16x128xf32>
    %12 = arith.maximumf %9, %11 : vector<16x128xf32>
    %cst_7 = arith.constant 9.99999997E-7 : f32
    %13 = vector.broadcast %cst_7 : f32 to vector<16x128xf32>
    %14 = arith.addf %12, %13 : vector<16x128xf32>
    %15 = arith.mulf %14, %14 : vector<16x128xf32>
    %16 = arith.mulf %15, %15 : vector<16x128xf32>
    %c0_8 = arith.constant 0 : index
    %c0_9 = arith.constant 0 : index
    %17 = vector.load %arg5[%c0_8, %c0_9] : memref<128x128xf32, #tpu.memory_space<vmem>>, vector<128x128xf32>
    %cst_10 = arith.constant dense<0.000000e+00> : vector<16x128xf32>
    %18 = tpu.matmul %15, %17, %cst_10 {dimension_numbers = #tpu.dot_dimension_numbers<[1], [0], [0], [1], [0, 0, 1, 1], [], []>} : vector<16x128xf32>, vector<128x128xf32>, vector<16x128xf32> -> vector<16x128xf32>
    %cst_11 = arith.constant dense<0.000000e+00> : vector<16x128xf32>
    %19 = tpu.matmul %16, %17, %cst_11 {dimension_numbers = #tpu.dot_dimension_numbers<[1], [0], [0], [1], [0, 0, 1, 1], [], []>} : vector<16x128xf32>, vector<128x128xf32>, vector<16x128xf32> -> vector<16x128xf32>
    %20 = math.sqrt %18 : vector<16x128xf32>
    %21 = math.rsqrt %19 : vector<16x128xf32>
    %22 = arith.mulf %20, %21 : vector<16x128xf32>
    %c0_12 = arith.constant 0 : index
    %23 = memref.load %arg6[%c0_12] : memref<1xf32, #tpu.memory_space<smem>>
    %24 = vector.broadcast %23 : f32 to vector<16x128xf32>
    %25 = arith.mulf %22, %24 : vector<16x128xf32>
    %26 = arith.mulf %15, %25 : vector<16x128xf32>
    %c0_13 = arith.constant 0 : index
    %c0_14 = arith.constant 0 : index
    %c0_15 = arith.constant 0 : index
    %27 = vector.load %arg7[%c0_13, %c0_14, %c0_15] : memref<1x128x128xf32, #tpu.memory_space<vmem>>, vector<1x128x128xf32>
    %28 = vector.shape_cast %27 : vector<1x128x128xf32> to vector<128x128xf32>
    %cst_16 = arith.constant dense<0.000000e+00> : vector<128x128xf32>
    %29 = tpu.matmul %26, %10, %cst_16 {dimension_numbers = #tpu.dot_dimension_numbers<[0], [0], [1], [1], [0, 1, 1, 1], [], []>} : vector<16x128xf32>, vector<16x128xf32>, vector<128x128xf32> -> vector<128x128xf32>
    %30 = arith.addf %28, %29 : vector<128x128xf32>
    %c0_17 = arith.constant 0 : index
    %c0_18 = arith.constant 0 : index
    %c0_19 = arith.constant 0 : index
    %31 = vector.load %arg7[%c0_17, %c0_18, %c0_19] : memref<1x128x128xf32, #tpu.memory_space<vmem>>, vector<1x128x128xf32>
    %32 = vector.shape_cast %31 : vector<1x128x128xf32> to vector<128x128xf32>
    %33 = vector.shape_cast %30 : vector<128x128xf32> to vector<1x128x128xf32>
    tpu.vector_store %arg7[%c0_17, %c0_18, %c0_19], %33 {strides = array<i32>} : memref<1x128x128xf32, #tpu.memory_space<vmem>>, vector<1x128x128xf32>,
    %c0_20 = arith.constant 0 : index
    %c0_21 = arith.constant 0 : index
    %c0_22 = arith.constant 0 : index
    %34 = vector.load %arg8[%c0_20, %c0_21, %c0_22] : memref<1x1x128xf32, #tpu.memory_space<vmem>>, vector<1x1x128xf32>
    %35 = vector.shape_cast %34 : vector<1x1x128xf32> to vector<1x128xf32>
    %cst_23 = arith.constant dense<0.000000e+00> : vector<128xf32>
    %36 = vector.multi_reduction <add>, %26, %cst_23 [0] : vector<16x128xf32> to vector<128xf32>
    %37 = vector.shape_cast %36 : vector<128xf32> to vector<1x128xf32>
    %38 = arith.addf %35, %37 : vector<1x128xf32>
    %c0_24 = arith.constant 0 : index
    %c0_25 = arith.constant 0 : index
    %c0_26 = arith.constant 0 : index
    %39 = vector.load %arg8[%c0_24, %c0_25, %c0_26] : memref<1x1x128xf32, #tpu.memory_space<vmem>>, vector<1x1x128xf32>
    %40 = vector.shape_cast %39 : vector<1x1x128xf32> to vector<1x128xf32>
    %41 = vector.shape_cast %38 : vector<1x128xf32> to vector<1x1x128xf32>
    tpu.vector_store %arg8[%c0_24, %c0_25, %c0_26], %41 {strides = array<i32>} : memref<1x1x128xf32, #tpu.memory_space<vmem>>, vector<1x1x128xf32>,
    return
  }
  func.func @transform_0(%arg0: i32, %arg1: i32) -> (i32, i32) {
    %c1_i32 = arith.constant 1 : i32
    %0 = arith.muli %arg0, %c1_i32 : i32
    %1 = arith.addi %0, %arg1 : i32
    %c0_i32 = arith.constant 0 : i32
    %c0_i32_0 = arith.constant 0 : i32
    return %1, %c0_i32 : i32, i32
  }
  func.func @transform_1(%arg0: i32, %arg1: i32) -> (i32, i32) {
    %c0_i32 = arith.constant 0 : i32
    %c0_i32_0 = arith.constant 0 : i32
    %c0_i32_1 = arith.constant 0 : i32
    return %c0_i32, %c0_i32_0 : i32, i32
  }
  func.func @transform_2(%arg0: i32, %arg1: i32) -> (i32, i32) {
    %c0_i32 = arith.constant 0 : i32
    %c0_i32_0 = arith.constant 0 : i32
    %c0_i32_1 = arith.constant 0 : i32
    return %c0_i32, %c0_i32_0 : i32, i32
  }
  func.func @transform_3(%arg0: i32, %arg1: i32) -> (i32, i32) {
    %c0_i32 = arith.constant 0 : i32
    %c0_i32_0 = arith.constant 0 : i32
    %c0_i32_1 = arith.constant 0 : i32
    return %c0_i32, %c0_i32_0 : i32, i32
  }
  func.func @transform_4(%arg0: i32, %arg1: i32) -> i32 {
    %c0_i32 = arith.constant 0 : i32
    %c0_i32_0 = arith.constant 0 : i32
    return %c0_i32 : i32
  }
  func.func @transform_5(%arg0: i32, %arg1: i32) -> (i32, i32, i32) {
    %c0_i32 = arith.constant 0 : i32
    %c0_i32_0 = arith.constant 0 : i32
    %c0_i32_1 = arith.constant 0 : i32
    return %arg0, %c0_i32, %c0_i32_0 : i32, i32, i32
  }
  func.func @transform_6(%arg0: i32, %arg1: i32) -> (i32, i32, i32) {
    %c0_i32 = arith.constant 0 : i32
    %c0_i32_0 = arith.constant 0 : i32
    %c0_i32_1 = arith.constant 0 : i32
    return %arg0, %c0_i32, %c0_i32_0 : i32, i32, i32
  }
}

</mosaic_0001>

<llo_original>
// kernel: tpu_custom_call.1
$region0: #{tpu_custom_call.1}
  #allocation0 [shape = 'u32[]', space=smem, size = 0x4, offset = 0x4, fixed_abs, tag = 'smem constant byte address 0x4 - core index']
  #allocation1 [shape = 'u32[72,128]{1,0:T(1,128)}', space=vmem, size = 0x9000, scoped, tag = 'internal scratch']
  #allocation2 [shape = 'f32[1]{0:T(128)S(6)}', space=smem, size = 0x200, scoped, tag = 'scoped memory for tpu_custom_call.1']
  %s0 = inlined_call_operand.hbm [shape: f32[16,33], index: 0, kind: input, shape index: {}]
  %s1 = inlined_call_operand.hbm [shape: f32[33,256], index: 1, kind: input, shape index: {}]
  %s2 = inlined_call_operand.vmem [shape: f32[1,256], index: 2, kind: input, shape index: {}]
  %s3 = inlined_call_operand.hbm [shape: f32[128,128], index: 3, kind: input, shape index: {}]
  %s4 = inlined_call_operand.<no memory space> [shape: f32[1], index: 4, kind: input, shape index: {}]
  %s5 = inlined_call_operand.hbm [shape: f32[1,128,128], index: 5, kind: output, shape index: {0}]
  %s6 = inlined_call_operand.hbm [shape: f32[1,1,128], index: 6, kind: output, shape index: {1}]
  %7 = xla_tuple %s5, %s6
  %s8 = sld [smem:[#allocation0]]
  $region54: #{tpu_custom_call.1} parent=0
    _
  %s10 = ssub.s32 1, %s8
  %s11 = scalar_select 0, %s10, %s8
  %12 = sst [smem:[#allocation2]] %s4
  $region1: #{tpu_custom_call.1} parent=0
    #allocation3 [shape = 'u8[8192]{0}', space=vmem, size = 0x2000, scoped, tag = 'input window, operand 0, single buffered']
    #allocation4 [shape = 's32[1]{0}', space=sflag, size = 0x4, scoped, tag = 'scoped memory for tpu_custom_call.1']
    #allocation5 [shape = 's32[1]{0}', space=sflag, size = 0x4, scoped, tag = 'scoped memory for tpu_custom_call.1']
    #allocation6 [shape = 'u8[40960]{0}', space=vmem, size = 0xa000, scoped, tag = 'input window, operand 1, single buffered']
    #allocation7 [shape = 's32[1]{0}', space=sflag, size = 0x4, scoped, tag = 'scoped memory for tpu_custom_call.1']
    #allocation8 [shape = 'u8[65536]{0}', space=vmem, size = 0x10000, scoped, tag = 'input window, operand 3, single buffered']
    #allocation9 [shape = 'u8[65536]{0}', space=vmem, size = 0x10000, scoped, tag = 'output window, operand 0, single buffered']
    #allocation10 [shape = 'u8[512]{0}', space=vmem, size = 0x400, scoped, tag = 'output window, operand 1, single buffered']
    #allocation11 [shape = 's32[1]{0}', space=sflag, size = 0x4, scoped, tag = 'scoped memory for tpu_custom_call.1']
    %13 = vsyncpa [#allocation4], 0
    %14 = vsyncpa [#allocation7], 0
    %15 = vsyncpa [#allocation5], 0
    %16 = vsyncpa [#allocation11], 0
    // Predicated region
    $region2: #{tpu_custom_call.1} parent=1 // pred_check
      _
    $region3: #{tpu_custom_call.1} parent=1 // pred_check_branch
      %18 = sbr.rel (0) target = $region5
    $region4: #{tpu_custom_call.1} parent=1 // pred_region
      %s19 = sadd.s32 0, 0
      %s20 = smul.u32 2, %s19
      %22 = vsyncadd [#allocation4], 0
      %s23 = smul.addr %s20, 8
      %s24 = scalar_lea.hbm %s0, %s23
      %s25 = sshll.u32 %s24, 4
      %s26 = int_to_ptr.hbm [resolvable:$true] %s25
      %s27 = sshll.u32 [#allocation3], 4
      %s28 = int_to_ptr.vmem [resolvable:$true] %s27
      %33 = dma.hbm_to_vmem [thread:$0]  %s26, 256, %s28, [#allocation4], 128, 128, 8
    $region5: #{tpu_custom_call.1} parent=1 // pred_fallthru
      _
    // Predicated region
    $region6: #{tpu_custom_call.1} parent=1 // pred_check
      _
    $region7: #{tpu_custom_call.1} parent=1 // pred_check_branch
      %35 = sbr.rel (0) target = $region9
    $region8: #{tpu_custom_call.1} parent=1 // pred_region
      %37 = vsyncadd [#allocation7], 0
      %s38 = sshll.u32 %s1, 4
      %s39 = int_to_ptr.hbm [resolvable:$true] %s38
      %s40 = sshll.u32 [#allocation6], 4
      %s41 = int_to_ptr.vmem [resolvable:$true] %s40
      %46 = dma.hbm_to_vmem [thread:$0]  %s39, 1280, %s41, [#allocation7], 256, 256, 16
    $region9: #{tpu_custom_call.1} parent=1 // pred_fallthru
      _
    // Predicated region
    $region10: #{tpu_custom_call.1} parent=1 // pred_check
      _
    $region11: #{tpu_custom_call.1} parent=1 // pred_check_branch
      %48 = sbr.rel (0) target = $region13
    $region12: #{tpu_custom_call.1} parent=1 // pred_region
      _
    $region13: #{tpu_custom_call.1} parent=1 // pred_fallthru
      _
    // Predicated region
    $region14: #{tpu_custom_call.1} parent=1 // pred_check
      _
    $region15: #{tpu_custom_call.1} parent=1 // pred_check_branch
      %50 = sbr.rel (0) target = $region17
    $region16: #{tpu_custom_call.1} parent=1 // pred_region
      %52 = vsyncadd [#allocation7], 0
      %s53 = sshll.u32 %s3, 4
      %s54 = int_to_ptr.hbm [resolvable:$true] %s53
      %s55 = sshll.u32 [#allocation8], 4
      %s56 = int_to_ptr.vmem [resolvable:$true] %s55
      %61 = dma.hbm_to_vmem [thread:$0]  %s54, 2048, %s56, [#allocation7], 128, 128, 8
    $region17: #{tpu_custom_call.1} parent=1 // pred_fallthru
      _
    // Predicated region
    $region18: #{tpu_custom_call.1} parent=1 // pred_check
      _
    $region19: #{tpu_custom_call.1} parent=1 // pred_check_branch
      %63 = sbr.rel (0) target = $region21
    $region20: #{tpu_custom_call.1} parent=1 // pred_region
      _
    $region21: #{tpu_custom_call.1} parent=1 // pred_fallthru
      _
    // Predicated region
    $region22: #{tpu_custom_call.1} parent=1 // pred_check
      _
    $region23: #{tpu_custom_call.1} parent=1 // pred_check_branch
      %65 = sbr.rel (0) target = $region25
    $region24: #{tpu_custom_call.1} parent=1 // pred_region
      %67 = dma.done [#allocation4], 256
    $region25: #{tpu_custom_call.1} parent=1 // pred_fallthru
      _
    // Predicated region
    $region26: #{tpu_custom_call.1} parent=1 // pred_check
      _
    $region27: #{tpu_custom_call.1} parent=1 // pred_check_branch
      %69 = sbr.rel (0) target = $region29
    $region28: #{tpu_custom_call.1} parent=1 // pred_region
      %71 = dma.done [#allocation7], 1280
    $region29: #{tpu_custom_call.1} parent=1 // pred_fallthru
      _
    // Predicated region
    $region30: #{tpu_custom_call.1} parent=1 // pred_check
      _
    $region31: #{tpu_custom_call.1} parent=1 // pred_check_branch
      %73 = sbr.rel (0) target = $region33
    $region32: #{tpu_custom_call.1} parent=1 // pred_region
      %75 = dma.done [#allocation7], 2048
    $region33: #{tpu_custom_call.1} parent=1 // pred_fallthru
      _
    %s76 = sadd.s32 0, 0
    %s77 = smul.u32 2, %s76
    %p78 = scmp.eq.s32.totalorder 0, 0
    // Predicated region
    $region34: #{tpu_custom_call.1} parent=1 // pred_check
      %p79 = pneg %p78
    $region35: #{tpu_custom_call.1} parent=1 // pred_check_branch
      %81 = sbr.rel (%p79) target = $region37
    $region36: #{tpu_custom_call.1} parent=1 // pred_region
      %82 = vst [vmem:[#allocation9] sm:$0xff] 0.0
      %83 = vst [vmem:[#allocation9 + $0x8] sm:$0xff] 0.0
      %84 = vst [vmem:[#allocation9 + $0x10] sm:$0xff] 0.0
      %85 = vst [vmem:[#allocation9 + $0x18] sm:$0xff] 0.0
      %86 = vst [vmem:[#allocation9 + $0x20] sm:$0xff] 0.0
      %87 = vst [vmem:[#allocation9 + $0x28] sm:$0xff] 0.0
      %88 = vst [vmem:[#allocation9 + $0x30] sm:$0xff] 0.0
      %89 = vst [vmem:[#allocation9 + $0x38] sm:$0xff] 0.0
      %90 = vst [vmem:[#allocation9 + $0x40] sm:$0xff] 0.0
      %91 = vst [vmem:[#allocation9 + $0x48] sm:$0xff] 0.0
      %92 = vst [vmem:[#allocation9 + $0x50] sm:$0xff] 0.0
      %93 = vst [vmem:[#allocation9 + $0x58] sm:$0xff] 0.0
      %94 = vst [vmem:[#allocation9 + $0x60] sm:$0xff] 0.0
      %95 = vst [vmem:[#allocation9 + $0x68] sm:$0xff] 0.0
      %96 = vst [vmem:[#allocation9 + $0x70] sm:$0xff] 0.0
      %97 = vst [vmem:[#allocation9 + $0x78] sm:$0xff] 0.0
      %98 = vst [vmem:[#allocation10] sm:$0x1] 0.0
    $region37: #{tpu_custom_call.1} parent=1 // pred_fallthru
      _
    %v99 = vld [vmem:[#allocation3] sm:$0xff]
    %v100 = vld [vmem:[#allocation3 + $0x8] sm:$0xff]
    %v101 = vld [vmem:[#allocation6] sm:$0xff]
    %v102 = vld [vmem:[#allocation6 + $0x8] sm:$0xff]
    %v103 = vld [vmem:[#allocation6 + $0x10] sm:$0xff]
    %v104 = vld [vmem:[#allocation6 + $0x18] sm:$0xff]
    %v105 = vld [vmem:[#allocation6 + $0x20] sm:$0xff]
    %v106 = vld [vmem:[#allocation6 + $0x28] sm:$0xff]
    %v107 = vld [vmem:[#allocation6 + $0x30] sm:$0xff]
    %v108 = vld [vmem:[#allocation6 + $0x38] sm:$0xff]
    %v109 = vld [vmem:[#allocation6 + $0x40] sm:$0x1]
    %v110 = vld [vmem:[#allocation6 + $0x48] sm:$0x1]
    %v111 = vld [vmem:[%s2] sm:$0x3]
    %v113 = vperm.slane %v111, 0
    %v114 = vperm.slane %v111, 1
    %vm117 = vcmask 269312
    %v119 = vsel %vm117, %v99, 0
    %v122 = vsel %vm117, %v100, 0
    %vm124 = vcmask 1040384
    %v126 = vsel %vm124, %v109, 0
    %v129 = vsel %vm124, %v110, 0
    %131 = vmatpush.msra.mxu0 0.0
    %132 = vmatpush.msra.mxu0 0.0
    %133 = vmatpush.msra.mxu0 0.0
    %134 = vmatpush.msra.mxu0 0.0
    %135 = vmatpush.msra.mxu0 0.0
    %136 = vmatpush.msra.mxu0 0.0
    %137 = vmatpush.msra.mxu0 0.0
    %138 = vmatpush.msra.mxu0 0.0
    %139 = vmatpush.msra.mxu0 0.0
    %140 = vmatpush.msra.mxu0 0.0
    %141 = vmatpush.msra.mxu0 0.0
    %142 = vmatpush.msra.mxu0 %v126
    %143 = vmatpush.msra.mxu0 %v107
    %144 = vmatpush.msra.mxu0 %v105
    %145 = vmatpush.msra.mxu0 %v103
    %146 = vmatpush.msra.mxu0 %v101
    %147 = vmatmul.f32.gmra.mxu0 %v119
    %v148 = vpop.f32.mrf.mxu0
    %v149 = vadd.f32 %v113, %v148
    %150 = vmatmul.f32.gmra.mxu0 %v122
    %v151 = vpop.f32.mrf.mxu0
    %v152 = vadd.f32 %v113, %v151
    %153 = vdwg.mxu0
    %154 = vmatpush.msra.mxu0 0.0
    %155 = vmatpush.msra.mxu0 0.0
    %156 = vmatpush.msra.mxu0 0.0
    %157 = vmatpush.msra.mxu0 0.0
    %158 = vmatpush.msra.mxu0 0.0
    %159 = vmatpush.msra.mxu0 0.0
    %160 = vmatpush.msra.mxu0 0.0
    %161 = vmatpush.msra.mxu0 0.0
    %162 = vmatpush.msra.mxu0 0.0
    %163 = vmatpush.msra.mxu0 0.0
    %164 = vmatpush.msra.mxu0 0.0
    %165 = vmatpush.msra.mxu0 %v129
    %166 = vmatpush.msra.mxu0 %v108
    %167 = vmatpush.msra.mxu0 %v106
    %168 = vmatpush.msra.mxu0 %v104
    %169 = vmatpush.msra.mxu0 %v102
    %170 = vmatmul.f32.gmra.mxu0 %v119
    %v171 = vpop.f32.mrf.mxu0
    %v172 = vadd.f32 %v114, %v171
    %173 = vmatmul.f32.gmra.mxu0 %v122
    %v174 = vpop.f32.mrf.mxu0
    %v175 = vadd.f32 %v114, %v174
    %176 = vdwg.mxu0
    %v177 = vmax.f32 %v149, 0.0
    %v178 = vmax.f32 %v152, 0.0
    %v179 = vadd.f32 %v177, 1e-06
    %v180 = vadd.f32 %v178, 1e-06
    %v181 = vmul.f32 %v179, %v179
    %v182 = vmul.f32 %v180, %v180
    %v183 = vmul.f32 %v181, %v181
    %v184 = vmul.f32 %v182, %v182
    %v185 = vld [vmem:[#allocation8] sm:$0xff]
    %v186 = vld [vmem:[#allocation8 + $0x8] sm:$0xff]
    %v187 = vld [vmem:[#allocation8 + $0x10] sm:$0xff]
    %v188 = vld [vmem:[#allocation8 + $0x18] sm:$0xff]
    %v189 = vld [vmem:[#allocation8 + $0x20] sm:$0xff]
    %v190 = vld [vmem:[#allocation8 + $0x28] sm:$0xff]
    %v191 = vld [vmem:[#allocation8 + $0x30] sm:$0xff]
    %v192 = vld [vmem:[#allocation8 + $0x38] sm:$0xff]
    %v193 = vld [vmem:[#allocation8 + $0x40] sm:$0xff]
    %v194 = vld [vmem:[#allocation8 + $0x48] sm:$0xff]
    %v195 = vld [vmem:[#allocation8 + $0x50] sm:$0xff]
    %v196 = vld [vmem:[#allocation8 + $0x58] sm:$0xff]
    %v197 = vld [vmem:[#allocation8 + $0x60] sm:$0xff]
    %v198 = vld [vmem:[#allocation8 + $0x68] sm:$0xff]
    %v199 = vld [vmem:[#allocation8 + $0x70] sm:$0xff]
    %v200 = vld [vmem:[#allocation8 + $0x78] sm:$0xff]
    %201 = vmatpush.msra.mxu0 %v200
    %202 = vmatpush.msra.mxu0 %v199
    %203 = vmatpush.msra.mxu0 %v198
    %204 = vmatpush.msra.mxu0 %v197
    %205 = vmatpush.msra.mxu0 %v196
    %206 = vmatpush.msra.mxu0 %v195
    %207 = vmatpush.msra.mxu0 %v194
    %208 = vmatpush.msra.mxu0 %v193
    %209 = vmatpush.msra.mxu0 %v192
    %210 = vmatpush.msra.mxu0 %v191
    %211 = vmatpush.msra.mxu0 %v190
    %212 = vmatpush.msra.mxu0 %v189
    %213 = vmatpush.msra.mxu0 %v188
    %214 = vmatpush.msra.mxu0 %v187
    %215 = vmatpush.msra.mxu0 %v186
    %216 = vmatpush.msra.mxu0 %v185
    %217 = vmatmul.f32.gmra.mxu0 %v181
    %v218 = vpop.f32.mrf.mxu0
    %v219 = vadd.f32 0.0, %v218
    %220 = vmatmul.f32.gmra.mxu0 %v182
    %v221 = vpop.f32.mrf.mxu0
    %v222 = vadd.f32 0.0, %v221
    %223 = vdwg.mxu0
    %224 = vmatpush.msra.mxu0 %v200
    %225 = vmatpush.msra.mxu0 %v199
    %226 = vmatpush.msra.mxu0 %v198
    %227 = vmatpush.msra.mxu0 %v197
    %228 = vmatpush.msra.mxu0 %v196
    %229 = vmatpush.msra.mxu0 %v195
    %230 = vmatpush.msra.mxu0 %v194
    %231 = vmatpush.msra.mxu0 %v193
    %232 = vmatpush.msra.mxu0 %v192
    %233 = vmatpush.msra.mxu0 %v191
    %234 = vmatpush.msra.mxu0 %v190
    %235 = vmatpush.msra.mxu0 %v189
    %236 = vmatpush.msra.mxu0 %v188
    %237 = vmatpush.msra.mxu0 %v187
    %238 = vmatpush.msra.mxu0 %v186
    %239 = vmatpush.msra.mxu0 %v185
    %240 = vmatmul.f32.gmra.mxu0 %v183
    %v241 = vpop.f32.mrf.mxu0
    %v242 = vadd.f32 0.0, %v241
    %243 = vmatmul.f32.gmra.mxu0 %v184
    %v244 = vpop.f32.mrf.mxu0
    %v245 = vadd.f32 0.0, %v244
    %246 = vdwg.mxu0
    %v247 = vrsqrt.pop %v219
    %v248 = vmul.f32 %v247, %v219
    %v249 = vmul.f32 %v248, %v247
    %v250 = vmul.f32 0.5, %v249
    %v251 = vsub.f32 1.5, %v250
    %v252 = vmul.f32 %v247, %v251
    %v253 = vmul.f32 %v219, %v252
    %vm254 = vcmp.eq.f32.partialorder %v219, inf
    %v255 = vsel %vm254, %v219, %v253
    %vm256 = vcmp.eq.f32.partialorder %v219, 0.0
    %v257 = vand.u32 %v219, 2147483648
    %v258 = vsel %vm256, %v257, %v255
    %v259 = vrsqrt.pop %v222
    %v260 = vmul.f32 %v259, %v222
    %v261 = vmul.f32 %v260, %v259
    %v262 = vmul.f32 0.5, %v261
    %v263 = vsub.f32 1.5, %v262
    %v264 = vmul.f32 %v259, %v263
    %v265 = vmul.f32 %v222, %v264
    %vm266 = vcmp.eq.f32.partialorder %v222, inf
    %v267 = vsel %vm266, %v222, %v265
    %vm268 = vcmp.eq.f32.partialorder %v222, 0.0
    %v269 = vand.u32 %v222, 2147483648
    %v270 = vsel %vm268, %v269, %v267
    %v271 = vrsqrt.pop %v242
    %v272 = vmul.f32 %v271, %v242
    %v273 = vmul.f32 %v272, %v271
    %v274 = vmul.f32 0.5, %v273
    %v275 = vsub.f32 1.5, %v274
    %v276 = vmul.f32 %v271, %v275
    %vm277 = vweird.f32 %v242
    %vm278 = vweird.f32 %v271
    %vm279 = vmor %vm277, %vm278
    %v280 = vsel %vm279, %v271, %v276
    %v281 = vrsqrt.pop %v245
    %v282 = vmul.f32 %v281, %v245
    %v283 = vmul.f32 %v282, %v281
    %v284 = vmul.f32 0.5, %v283
    %v285 = vsub.f32 1.5, %v284
    %v286 = vmul.f32 %v281, %v285
    %vm287 = vweird.f32 %v245
    %vm288 = vweird.f32 %v281
    %vm289 = vmor %vm287, %vm288
    %v290 = vsel %vm289, %v281, %v286
    %v291 = vmul.f32 %v258, %v280
    %v292 = vmul.f32 %v270, %v290
    %s293 = sld [smem:[#allocation2]]
    %v294 = vstv %s293
    %v295 = vmul.f32 %v291, %v294
    %v296 = vmul.f32 %v292, %v294
    %v297 = vmul.f32 %v181, %v295
    %v298 = vmul.f32 %v182, %v296
    %v299 = vld [vmem:[#allocation9] sm:$0xff]
    %v300 = vld [vmem:[#allocation9 + $0x8] sm:$0xff]
    %v301 = vld [vmem:[#allocation9 + $0x10] sm:$0xff]
    %v302 = vld [vmem:[#allocation9 + $0x18] sm:$0xff]
    %v303 = vld [vmem:[#allocation9 + $0x20] sm:$0xff]
    %v304 = vld [vmem:[#allocation9 + $0x28] sm:$0xff]
    %v305 = vld [vmem:[#allocation9 + $0x30] sm:$0xff]
    %v306 = vld [vmem:[#allocation9 + $0x38] sm:$0xff]
    %v307 = vld [vmem:[#allocation9 + $0x40] sm:$0xff]
    %v308 = vld [vmem:[#allocation9 + $0x48] sm:$0xff]
    %v309 = vld [vmem:[#allocation9 + $0x50] sm:$0xff]
    %v310 = vld [vmem:[#allocation9 + $0x58] sm:$0xff]
    %v311 = vld [vmem:[#allocation9 + $0x60] sm:$0xff]
    %v312 = vld [vmem:[#allocation9 + $0x68] sm:$0xff]
    %v313 = vld [vmem:[#allocation9 + $0x70] sm:$0xff]
    %v314 = vld [vmem:[#allocation9 + $0x78] sm:$0xff]
    %315 = vxpose.xlu0.b32.start [1/16] %v297, 128
    %316 = vxpose.xlu0.b32.cont [2/16] %v298, 128
    %317 = vxpose.xlu0.b32.cont [3/16] 0.0, 128
    %318 = vxpose.xlu0.b32.cont [4/16] 0.0, 128
    %319 = vxpose.xlu0.b32.cont [5/16] 0.0, 128
    %320 = vxpose.xlu0.b32.cont [6/16] 0.0, 128
    %321 = vxpose.xlu0.b32.cont [7/16] 0.0, 128
    %322 = vxpose.xlu0.b32.cont [8/16] 0.0, 128
    %323 = vxpose.xlu0.b32.cont [9/16] 0.0, 128
    %324 = vxpose.xlu0.b32.cont [10/16] 0.0, 128
    %325 = vxpose.xlu0.b32.cont [11/16] 0.0, 128
    %326 = vxpose.xlu0.b32.cont [12/16] 0.0, 128
    %327 = vxpose.xlu0.b32.cont [13/16] 0.0, 128
    %328 = vxpose.xlu0.b32.cont [14/16] 0.0, 128
    %329 = vxpose.xlu0.b32.cont [15/16] 0.0, 128
    %330 = vxpose.xlu0.b32.end [16/16] 0.0, 128
    %v331 = vpop.trf.xlu0
    %v332 = vpop.trf.xlu0
    %v333 = vpop.trf.xlu0
    %v334 = vpop.trf.xlu0
    %v335 = vpop.trf.xlu0
    %v336 = vpop.trf.xlu0
    %v337 = vpop.trf.xlu0
    %v338 = vpop.trf.xlu0
    %v339 = vpop.trf.xlu0
    %v340 = vpop.trf.xlu0
    %v341 = vpop.trf.xlu0
    %v342 = vpop.trf.xlu0
    %v343 = vpop.trf.xlu0
    %v344 = vpop.trf.xlu0
    %v345 = vpop.trf.xlu0
    %v346 = vpop.trf.xlu0
    %vm347 = vcmask 130048
    %v349 = vsel %vm347, %v331, 0
    %v352 = vsel %vm347, %v332, 0
    %v355 = vsel %vm347, %v333, 0
    %v358 = vsel %vm347, %v334, 0
    %v361 = vsel %vm347, %v335, 0
    %v364 = vsel %vm347, %v336, 0
    %v367 = vsel %vm347, %v337, 0
    %v370 = vsel %vm347, %v338, 0
    %v373 = vsel %vm347, %v339, 0
    %v376 = vsel %vm347, %v340, 0
    %v379 = vsel %vm347, %v341, 0
    %v382 = vsel %vm347, %v342, 0
    %v385 = vsel %vm347, %v343, 0
    %v388 = vsel %vm347, %v344, 0
    %v391 = vsel %vm347, %v345, 0
    %v394 = vsel %vm347, %v346, 0
    %396 = vmatpush.msra.mxu0 0.0
    %397 = vmatpush.msra.mxu0 0.0
    %398 = vmatpush.msra.mxu0 0.0
    %399 = vmatpush.msra.mxu0 0.0
    %400 = vmatpush.msra.mxu0 0.0
    %401 = vmatpush.msra.mxu0 0.0
    %402 = vmatpush.msra.mxu0 0.0
    %403 = vmatpush.msra.mxu0 0.0
    %404 = vmatpush.msra.mxu0 0.0
    %405 = vmatpush.msra.mxu0 0.0
    %406 = vmatpush.msra.mxu0 0.0
    %407 = vmatpush.msra.mxu0 0.0
    %408 = vmatpush.msra.mxu0 0.0
    %409 = vmatpush.msra.mxu0 0.0
    %410 = vmatpush.msra.mxu0 %v175
    %411 = vmatpush.msra.mxu0 %v172
    %412 = vmatmul.f32.gmra.mxu0 %v349
    %v413 = vpop.f32.mrf.mxu0
    %v414 = vadd.f32 0.0, %v413
    %415 = vmatmul.f32.gmra.mxu0 %v352
    %v416 = vpop.f32.mrf.mxu0
    %v417 = vadd.f32 0.0, %v416
    %418 = vmatmul.f32.gmra.mxu0 %v355
    %v419 = vpop.f32.mrf.mxu0
    %v420 = vadd.f32 0.0, %v419
    %421 = vmatmul.f32.gmra.mxu0 %v358
    %v422 = vpop.f32.mrf.mxu0
    %v423 = vadd.f32 0.0, %v422
    %424 = vmatmul.f32.gmra.mxu0 %v361
    %v425 = vpop.f32.mrf.mxu0
    %v426 = vadd.f32 0.0, %v425
    %427 = vmatmul.f32.gmra.mxu0 %v364
    %v428 = vpop.f32.mrf.mxu0
    %v429 = vadd.f32 0.0, %v428
    %430 = vmatmul.f32.gmra.mxu0 %v367
    %v431 = vpop.f32.mrf.mxu0
    %v432 = vadd.f32 0.0, %v431
    %433 = vmatmul.f32.gmra.mxu0 %v370
    %v434 = vpop.f32.mrf.mxu0
    %v435 = vadd.f32 0.0, %v434
    %436 = vmatmul.f32.gmra.mxu0 %v373
    %v437 = vpop.f32.mrf.mxu0
    %v438 = vadd.f32 0.0, %v437
    %439 = vmatmul.f32.gmra.mxu0 %v376
    %v440 = vpop.f32.mrf.mxu0
    %v441 = vadd.f32 0.0, %v440
    %442 = vmatmul.f32.gmra.mxu0 %v379
    %v443 = vpop.f32.mrf.mxu0
    %v444 = vadd.f32 0.0, %v443
    %445 = vmatmul.f32.gmra.mxu0 %v382
    %v446 = vpop.f32.mrf.mxu0
    %v447 = vadd.f32 0.0, %v446
    %448 = vmatmul.f32.gmra.mxu0 %v385
    %v449 = vpop.f32.mrf.mxu0
    %v450 = vadd.f32 0.0, %v449
    %451 = vmatmul.f32.gmra.mxu0 %v388
    %v452 = vpop.f32.mrf.mxu0
    %v453 = vadd.f32 0.0, %v452
    %454 = vmatmul.f32.gmra.mxu0 %v391
    %v455 = vpop.f32.mrf.mxu0
    %v456 = vadd.f32 0.0, %v455
    %457 = vmatmul.f32.gmra.mxu0 %v394
    %v458 = vpop.f32.mrf.mxu0
    %v459 = vadd.f32 0.0, %v458
    %460 = vdwg.mxu0
    %v461 = vadd.f32 %v299, %v414
    %v462 = vadd.f32 %v300, %v417
    %v463 = vadd.f32 %v301, %v420
    %v464 = vadd.f32 %v302, %v423
    %v465 = vadd.f32 %v303, %v426
    %v466 = vadd.f32 %v304, %v429
    %v467 = vadd.f32 %v305, %v432
    %v468 = vadd.f32 %v306, %v435
    %v469 = vadd.f32 %v307, %v438
    %v470 = vadd.f32 %v308, %v441
    %v471 = vadd.f32 %v309, %v444
    %v472 = vadd.f32 %v310, %v447
    %v473 = vadd.f32 %v311, %v450
    %v474 = vadd.f32 %v312, %v453
    %v475 = vadd.f32 %v313, %v456
    %v476 = vadd.f32 %v314, %v459
    %477 = vst [vmem:[#allocation9] sm:$0xff] %v461
    %478 = vst [vmem:[#allocation9 + $0x8] sm:$0xff] %v462
    %479 = vst [vmem:[#allocation9 + $0x10] sm:$0xff] %v463
    %480 = vst [vmem:[#allocation9 + $0x18] sm:$0xff] %v464
    %481 = vst [vmem:[#allocation9 + $0x20] sm:$0xff] %v465
    %482 = vst [vmem:[#allocation9 + $0x28] sm:$0xff] %v466
    %483 = vst [vmem:[#allocation9 + $0x30] sm:$0xff] %v467
    %484 = vst [vmem:[#allocation9 + $0x38] sm:$0xff] %v468
    %485 = vst [vmem:[#allocation9 + $0x40] sm:$0xff] %v469
    %486 = vst [vmem:[#allocation9 + $0x48] sm:$0xff] %v470
    %487 = vst [vmem:[#allocation9 + $0x50] sm:$0xff] %v471
    %488 = vst [vmem:[#allocation9 + $0x58] sm:$0xff] %v472
    %489 = vst [vmem:[#allocation9 + $0x60] sm:$0xff] %v473
    %490 = vst [vmem:[#allocation9 + $0x68] sm:$0xff] %v474
    %491 = vst [vmem:[#allocation9 + $0x70] sm:$0xff] %v475
    %492 = vst [vmem:[#allocation9 + $0x78] sm:$0xff] %v476
    %v493 = vld [vmem:[#allocation10] sm:$0x1]
    %v494 = vadd.f32 %v297, %v298
    %v495 = vrot.slane %v494, 4
    %v496 = vadd.f32 %v494, %v495
    %v497 = vrot.slane %v496, 2
    %v498 = vadd.f32 %v496, %v497
    %v499 = vrot.slane %v498, 1
    %v500 = vadd.f32 %v498, %v499
    %v501 = vadd.f32 %v493, %v500
    %502 = vst [vmem:[#allocation10] sm:$0x1] %v501
    // Predicated region
    $region38: #{tpu_custom_call.1} parent=1 // pred_check
      _
    $region39: #{tpu_custom_call.1} parent=1 // pred_check_branch
      %504 = sbr.rel (0) target = $region41
    $region40: #{tpu_custom_call.1} parent=1 // pred_region
      %506 = vsyncadd [#allocation5], 0
      %s507 = sshll.u32 [#allocation9], 4
      %s508 = int_to_ptr.vmem [resolvable:$true] %s507
      %s509 = sshll.u32 %s5, 4
      %s510 = int_to_ptr.hbm [resolvable:$true] %s509
      %515 = dma.vmem_to_hbm [thread:$0]  %s508, 2048, %s510, [#allocation5], 128, 128, 8
    $region41: #{tpu_custom_call.1} parent=1 // pred_fallthru
      _
    // Predicated region
    $region42: #{tpu_custom_call.1} parent=1 // pred_check
      _
    $region43: #{tpu_custom_call.1} parent=1 // pred_check_branch
      %517 = sbr.rel (0) target = $region45
    $region44: #{tpu_custom_call.1} parent=1 // pred_region
      %519 = vsyncadd [#allocation11], 0
      %s521 = sshll.u32 [#allocation10], 4
      %s522 = int_to_ptr.vmem [resolvable:$true] %s521
      %s523 = sshll.u32 %s6, 4
      %s524 = int_to_ptr.hbm [resolvable:$true] %s523
      %526 = dma.vmem_to_hbm [thread:$0]  %s522, 16, %s524, [#allocation11]
    $region45: #{tpu_custom_call.1} parent=1 // pred_fallthru
      _
    // Predicated region
    $region46: #{tpu_custom_call.1} parent=1 // pred_check
      _
    $region47: #{tpu_custom_call.1} parent=1 // pred_check_branch
      %528 = sbr.rel (0) target = $region49
    $region48: #{tpu_custom_call.1} parent=1 // pred_region
      %530 = dma.done [#allocation5], 2048
    $region49: #{tpu_custom_call.1} parent=1 // pred_fallthru
      _
    // Predicated region
    $region50: #{tpu_custom_call.1} parent=1 // pred_check
      _
    $region51: #{tpu_custom_call.1} parent=1 // pred_check_branch
      %532 = sbr.rel (0) target = $region53
    $region52: #{tpu_custom_call.1} parent=1 // pred_region
      %534 = dma.done [#allocation11], 16
    $region53: #{tpu_custom_call.1} parent=1 // pred_fallthru
      _
    %535 = vsyncpa [#allocation4], 1
    %536 = vsyncpa [#allocation7], 1
    %537 = vsyncpa [#allocation5], 1
    %538 = vsyncpa [#allocation11], 1

</llo_original>
